<compile_context>
chip_gen: v7x
topology: tpu7x:2x2x1
jax: 0.10.0
libtpu: 0.0.40
codegen_flags: <defaults>
</compile_context>

<pallas_src>
import functools

import jax
import jax.numpy as jnp
from jax.experimental import pallas as pl
from jax.experimental.pallas import tpu as pltpu


# ---------------------------------------------------------------------------
# Pass 1: streaming global pooling over the spatial axis.
#   x2 layout: (R, HW) with R = B*C folded onto sublanes.
#   grid = (row_blocks [parallel], spatial_tiles [arbitrary, reduction])
# ---------------------------------------------------------------------------
def _pool_kernel(x_ref, avg_ref, max_ref, soft_ref,
                 sum_sc, m_sc, se_sc, sxe_sc, *, inv_hw):
    j = pl.program_id(1)

    @pl.when(j == 0)
    def _init():
        sum_sc[...] = jnp.zeros_like(sum_sc)
        m_sc[...] = jnp.full_like(m_sc, -jnp.inf)
        se_sc[...] = jnp.zeros_like(se_sc)
        sxe_sc[...] = jnp.zeros_like(sxe_sc)

    x = x_ref[...].astype(jnp.float32)                     # (RB, T)

    # Online, max-stabilized soft-pool accumulation (flash-attention style).
    tile_max = jnp.max(x, axis=-1, keepdims=True)          # (RB, 1)
    m_new = jnp.maximum(m_sc[...], tile_max)
    rescale = jnp.exp(m_sc[...] - m_new)                   # == 0 on first tile
    e = jnp.exp(x - m_new)                                 # EUP slot

    sum_sc[...] = sum_sc[...] + jnp.sum(x, axis=-1, keepdims=True)
    se_sc[...] = se_sc[...] * rescale + jnp.sum(e, axis=-1, keepdims=True)
    sxe_sc[...] = sxe_sc[...] * rescale + jnp.sum(e * x, axis=-1, keepdims=True)
    m_sc[...] = m_new

    @pl.when(j == pl.num_programs(1) - 1)
    def _finalize():
        avg_ref[...] = sum_sc[...] * inv_hw
        max_ref[...] = m_sc[...]
        soft_ref[...] = sxe_sc[...] / se_sc[...]


# ---------------------------------------------------------------------------
# Pass 2: tiny MLP + sigmoid on resident (B, C) pooled vectors, then broadcast
# the attention over spatial tiles.  grid = (batch_blocks, spatial_tiles),
# both parallel (no reduction); the MLP is negligible and fully hidden under
# the HBM-bound broadcast store.
# ---------------------------------------------------------------------------
def _att_broadcast_kernel(avg_ref, max_ref, soft_ref,
                          w1_ref, b1_ref, w2_ref, b2_ref, o_ref):
    w1 = w1_ref[...]
    b1 = b1_ref[...]

    def mlp(v):  # Flatten -> Linear(C, C//r) -> ReLU
        h = jnp.dot(v, w1, preferred_element_type=jnp.float32) + b1
        return jnp.maximum(h, 0.0)

    pooladd = mlp(avg_ref[...]) + mlp(max_ref[...])        # (BB, Cr)
    weight_pool = mlp(soft_ref[...]) * pooladd             # (BB, Cr)
    logits = jnp.dot(weight_pool, w2_ref[...],
                     preferred_element_type=jnp.float32) + b2_ref[...]
    att = jax.nn.sigmoid(logits)                           # (BB, C)

    o_ref[...] = jnp.broadcast_to(att[:, :, None], o_ref.shape).astype(o_ref.dtype)


# ---------------------------------------------------------------------------
# Tiling helpers.
# ---------------------------------------------------------------------------
def _round_up(n, m):
    return ((n + m - 1) // m) * m


def _pick_spatial_tile(hw):
    # <= 512 lanes keeps double-buffered blocks small even on v7x's VMEM.
    for t in (512, 256, 128):
        if hw % t == 0:
            return t
    return hw  # fallback: full spatial extent as one block


def _pick_row_block(r_pad):
    for t in (256, 128, 64, 32, 16, 8):
        if r_pad % t == 0:
            return t
    return r_pad


def _pick_batch_block(b, c, tile, esize, budget=2 << 20):
    # Block second-to-last dims must be multiples of 8 or the full extent.
    cands = [d for d in range(b, 0, -1)
             if b % d == 0 and (d == b or d % 8 == 0)]
    for d in cands:
        if d * c * tile * esize <= budget:
            return d
    return cands[-1]


# ---------------------------------------------------------------------------
# Wrapper.
# ---------------------------------------------------------------------------
def channel_att(x, w1, b1, w2, b2, *, tile_hw=None):
    """x: (B, C, H, W) NCHW. Returns the attention map broadcast to x.shape."""
    B, C, H, W = x.shape
    HW = H * W
    Cr = w1.shape[1]
    R = B * C
    R_pad = _round_up(R, 8)

    tile = tile_hw if tile_hw is not None else _pick_spatial_tile(HW)
    assert HW % tile == 0, "tile_hw must divide H*W"
    row_blk = _pick_row_block(R_pad)

    # Fold B*C onto the sublane axis; pad rows to a multiple of 8 (padded rows
    # pool to harmless finite values and are sliced off afterwards).
    x2 = x.reshape(R, HW)
    if R_pad != R:
        x2 = jnp.pad(x2, ((0, R_pad - R), (0, 0)))

    # ---- Pass 1: pooled statistics ---------------------------------------
    grid1 = (R_pad // row_blk, HW // tile)
    avg_c, max_c, soft_c = pl.pallas_call(
        functools.partial(_pool_kernel, inv_hw=1.0 / HW),
        out_shape=(jax.ShapeDtypeStruct((R_pad, 1), jnp.float32),) * 3,
        grid_spec=pltpu.PrefetchScalarGridSpec(
            num_scalar_prefetch=0,
            grid=grid1,
            in_specs=[pl.BlockSpec((row_blk, tile), lambda i, j: (i, j))],
            out_specs=[pl.BlockSpec((row_blk, 1), lambda i, j: (i, 0))] * 3,
            scratch_shapes=[pltpu.VMEM((row_blk, 1), jnp.float32)] * 4,
        ),
        compiler_params=pltpu.CompilerParams(
            dimension_semantics=("parallel", "arbitrary")),
    )(x2)

    # Tiny (B*C) -> (B, C) relayouts done in XLA between the two passes.
    avg = avg_c[:R, 0].reshape(B, C)
    mx = max_c[:R, 0].reshape(B, C)
    soft = soft_c[:R, 0].reshape(B, C)

    # ---- Pass 2: attention + broadcast write ------------------------------
    esize = jnp.dtype(x.dtype).itemsize
    b_blk = _pick_batch_block(B, C, tile, esize)
    grid2 = (B // b_blk, HW // tile)

    batch2d = lambda i, j: (i, 0)
    const2d = lambda i, j: (0, 0)

    out = pl.pallas_call(
        _att_broadcast_kernel,
        out_shape=jax.ShapeDtypeStruct((B, C, HW), x.dtype),
        grid_spec=pltpu.PrefetchScalarGridSpec(
            num_scalar_prefetch=0,
            grid=grid2,
            in_specs=[
                pl.BlockSpec((b_blk, C), batch2d),   # avg pool
                pl.BlockSpec((b_blk, C), batch2d),   # max pool
                pl.BlockSpec((b_blk, C), batch2d),   # soft pool
                pl.BlockSpec((C, Cr), const2d),      # W1 (resident)
                pl.BlockSpec((1, Cr), const2d),      # b1
                pl.BlockSpec((Cr, C), const2d),      # W2
                pl.BlockSpec((1, C), const2d),       # b2
            ],
            out_specs=pl.BlockSpec((b_blk, C, tile), lambda i, j: (i, 0, j)),
        ),
        compiler_params=pltpu.CompilerParams(
            dimension_semantics=("parallel", "parallel")),
    )(avg, mx, soft, w1, b1.reshape(1, Cr), w2, b2.reshape(1, C))

    return out.reshape(B, C, H, W)


# ---------------------------------------------------------------------------
# Params + reference.
# ---------------------------------------------------------------------------
def init_params(key, gate_channels, reduction_ratio=2):
    """PyTorch-style uniform fan-in Linear init, stored transposed for v @ W."""
    c = gate_channels
    cr = c // reduction_ratio
    k1, k2, k3, k4 = jax.random.split(key, 4)
    bound1 = 1.0 / jnp.sqrt(c)
    bound2 = 1.0 / jnp.sqrt(cr)
    w1 = jax.random.uniform(k1, (c, cr), jnp.float32, -bound1, bound1)
    b1 = jax.random.uniform(k2, (cr,), jnp.float32, -bound1, bound1)
    w2 = jax.random.uniform(k3, (cr, c), jnp.float32, -bound2, bound2)
    b2 = jax.random.uniform(k4, (c,), jnp.float32, -bound2, bound2)
    return w1, b1, w2, b2


def channel_att_ref(x, w1, b1, w2, b2):
    """Plain-JAX reference for verification."""
    B, C, H, W = x.shape
    xf = x.reshape(B, C, H * W).astype(jnp.float32)
    avg = jnp.mean(xf, axis=-1)
    mx = jnp.max(xf, axis=-1)
    m = jnp.max(xf, axis=-1, keepdims=True)
    ex = jnp.exp(xf - m)
    soft = jnp.sum(ex * xf, axis=-1) / jnp.sum(ex, axis=-1)
    mlp = lambda v: jnp.maximum(v @ w1 + b1, 0.0)
    att = jax.nn.sigmoid((mlp(soft) * (mlp(avg) + mlp(mx))) @ w2 + b2)
    return jnp.broadcast_to(att[:, :, None, None], x.shape)


if __name__ == "__main__":
    key = jax.random.PRNGKey(0)
    k_x, k_p, k_x2 = jax.random.split(key, 3)

    # Config 1: gate_channels=4, reduction_ratio=2, 16x16 spatial.
    # tile_hw=128 forces a 2-step spatial reduction to exercise the
    # init / accumulate / finalize path.
    B, C, H, W = 2, 4, 16, 16
    x = jax.random.normal(k_x, (B, C, H, W), jnp.float32)
    w1, b1, w2, b2 = init_params(k_p, C, reduction_ratio=2)

    out = jax.block_until_ready(channel_att(x, w1, b1, w2, b2, tile_hw=128))
    ref = channel_att_ref(x, w1, b1, w2, b2)
    assert out.shape == (B, C, H, W)
    assert jnp.allclose(out, ref, atol=2e-3, rtol=1e-3)

    # Config 2: exercises row padding (B*C = 12 -> 16) and the full-extent
    # spatial-tile fallback (HW = 64 < 128), plus larger-magnitude inputs for
    # the stabilized soft-pool.
    B2, C2, H2, W2 = 3, 4, 8, 8
    x2 = jax.random.normal(k_x2, (B2, C2, H2, W2), jnp.float32) * 4.0
    w1b, b1b, w2b, b2b = init_params(k_p, C2, reduction_ratio=2)
    out2 = jax.block_until_ready(channel_att(x2, w1b, b1b, w2b, b2b))
    ref2 = channel_att_ref(x2, w1b, b1b, w2b, b2b)
    assert out2.shape == (B2, C2, H2, W2)
    assert jnp.allclose(out2, ref2, atol=2e-3, rtol=1e-3)

    print("KERNEL_OK")
</pallas_src>

<mosaic_0001>
module attributes {stable_mosaic.version = 11 : i64} {
  func.func @_pool_kernel(%arg0: i32, %arg1: i32, %arg2: memref<8x128xf32, #tpu.memory_space<vmem>>, %arg3: memref<8x1xf32, #tpu.memory_space<vmem>>, %arg4: memref<8x1xf32, #tpu.memory_space<vmem>>, %arg5: memref<8x1xf32, #tpu.memory_space<vmem>>, %arg6: memref<8x1xf32, #tpu.memory_space<vmem>>, %arg7: memref<8x1xf32, #tpu.memory_space<vmem>>, %arg8: memref<8x1xf32, #tpu.memory_space<vmem>>, %arg9: memref<8x1xf32, #tpu.memory_space<vmem>>) attributes {dimension_semantics = [#tpu.dimension_semantics<parallel>, #tpu.dimension_semantics<arbitrary>], iteration_bounds = array<i64: 1, 2>, scalar_prefetch = 0 : i64, scratch_operands = 4 : i64, tpu.core_type = #tpu.core_type<tc>, window_params = [{transform_indices = @transform_0, window_bounds = array<i64: 8, 128>}, {transform_indices = @transform_1, window_bounds = array<i64: 8, 1>}, {transform_indices = @transform_2, window_bounds = array<i64: 8, 1>}, {transform_indices = @transform_3, window_bounds = array<i64: 8, 1>}]} {
    %c0_i32 = arith.constant 0 : i32
    %0 = arith.cmpi eq, %arg1, %c0_i32 : i32
    %1 = arith.extui %0 : i1 to i32
    %c0_i32_0 = arith.constant 0 : i32
    %2 = arith.cmpi ne, %1, %c0_i32_0 : i32
    scf.if %2 {
      %cst_24 = arith.constant 0.000000e+00 : f32
      %36 = vector.broadcast %cst_24 : f32 to vector<8x1xf32>
      %c0_25 = arith.constant 0 : index
      %c0_26 = arith.constant 0 : index
      %37 = vector.load %arg6[%c0_25, %c0_26] : memref<8x1xf32, #tpu.memory_space<vmem>>, vector<8x1xf32>
      tpu.vector_store %arg6[%c0_25, %c0_26], %36 {strides = array<i32>} : memref<8x1xf32, #tpu.memory_space<vmem>>, vector<8x1xf32>,
      %cst_27 = arith.constant 0xFF800000 : f32
      %38 = vector.broadcast %cst_27 : f32 to vector<8x1xf32>
      %c0_28 = arith.constant 0 : index
      %c0_29 = arith.constant 0 : index
      %39 = vector.load %arg7[%c0_28, %c0_29] : memref<8x1xf32, #tpu.memory_space<vmem>>, vector<8x1xf32>
      tpu.vector_store %arg7[%c0_28, %c0_29], %38 {strides = array<i32>} : memref<8x1xf32, #tpu.memory_space<vmem>>, vector<8x1xf32>,
      %cst_30 = arith.constant 0.000000e+00 : f32
      %40 = vector.broadcast %cst_30 : f32 to vector<8x1xf32>
      %c0_31 = arith.constant 0 : index
      %c0_32 = arith.constant 0 : index
      %41 = vector.load %arg8[%c0_31, %c0_32] : memref<8x1xf32, #tpu.memory_space<vmem>>, vector<8x1xf32>
      tpu.vector_store %arg8[%c0_31, %c0_32], %40 {strides = array<i32>} : memref<8x1xf32, #tpu.memory_space<vmem>>, vector<8x1xf32>,
      %cst_33 = arith.constant 0.000000e+00 : f32
      %42 = vector.broadcast %cst_33 : f32 to vector<8x1xf32>
      %c0_34 = arith.constant 0 : index
      %c0_35 = arith.constant 0 : index
      %43 = vector.load %arg9[%c0_34, %c0_35] : memref<8x1xf32, #tpu.memory_space<vmem>>, vector<8x1xf32>
      tpu.vector_store %arg9[%c0_34, %c0_35], %42 {strides = array<i32>} : memref<8x1xf32, #tpu.memory_space<vmem>>, vector<8x1xf32>,
    } else {
    }
    %c0 = arith.constant 0 : index
    %c0_1 = arith.constant 0 : index
    %3 = vector.load %arg2[%c0, %c0_1] : memref<8x128xf32, #tpu.memory_space<vmem>>, vector<8x128xf32>
    %cst = arith.constant dense<0xFF800000> : vector<8xf32>
    %4 = vector.multi_reduction <maximumf>, %3, %cst [1] : vector<8x128xf32> to vector<8xf32>
    %5 = vector.shape_cast %4 : vector<8xf32> to vector<8x1xf32>
    %c0_2 = arith.constant 0 : index
    %c0_3 = arith.constant 0 : index
    %6 = vector.load %arg7[%c0_2, %c0_3] : memref<8x1xf32, #tpu.memory_space<vmem>>, vector<8x1xf32>
    %7 = arith.maximumf %6, %5 : vector<8x1xf32>
    %c0_4 = arith.constant 0 : index
    %c0_5 = arith.constant 0 : index
    %8 = vector.load %arg7[%c0_4, %c0_5] : memref<8x1xf32, #tpu.memory_space<vmem>>, vector<8x1xf32>
    %9 = arith.subf %8, %7 : vector<8x1xf32>
    %10 = math.exp %9 : vector<8x1xf32>
    %11 = vector.broadcast %7 : vector<8x1xf32> to vector<8x128xf32>
    %12 = arith.subf %3, %11 : vector<8x128xf32>
    %13 = math.exp %12 : vector<8x128xf32>
    %c0_6 = arith.constant 0 : index
    %c0_7 = arith.constant 0 : index
    %14 = vector.load %arg6[%c0_6, %c0_7] : memref<8x1xf32, #tpu.memory_space<vmem>>, vector<8x1xf32>
    %cst_8 = arith.constant dense<0.000000e+00> : vector<8xf32>
    %15 = vector.multi_reduction <add>, %3, %cst_8 [1] : vector<8x128xf32> to vector<8xf32>
    %16 = vector.shape_cast %15 : vector<8xf32> to vector<8x1xf32>
    %17 = arith.addf %14, %16 : vector<8x1xf32>
    %c0_9 = arith.constant 0 : index
    %c0_10 = arith.constant 0 : index
    %18 = vector.load %arg6[%c0_9, %c0_10] : memref<8x1xf32, #tpu.memory_space<vmem>>, vector<8x1xf32>
    tpu.vector_store %arg6[%c0_9, %c0_10], %17 {strides = array<i32>} : memref<8x1xf32, #tpu.memory_space<vmem>>, vector<8x1xf32>,
    %c0_11 = arith.constant 0 : index
    %c0_12 = arith.constant 0 : index
    %19 = vector.load %arg8[%c0_11, %c0_12] : memref<8x1xf32, #tpu.memory_space<vmem>>, vector<8x1xf32>
    %20 = arith.mulf %19, %10 : vector<8x1xf32>
    %cst_13 = arith.constant dense<0.000000e+00> : vector<8xf32>
    %21 = vector.multi_reduction <add>, %13, %cst_13 [1] : vector<8x128xf32> to vector<8xf32>
    %22 = vector.shape_cast %21 : vector<8xf32> to vector<8x1xf32>
    %23 = arith.addf %20, %22 : vector<8x1xf32>
    %c0_14 = arith.constant 0 : index
    %c0_15 = arith.constant 0 : index
    %24 = vector.load %arg8[%c0_14, %c0_15] : memref<8x1xf32, #tpu.memory_space<vmem>>, vector<8x1xf32>
    tpu.vector_store %arg8[%c0_14, %c0_15], %23 {strides = array<i32>} : memref<8x1xf32, #tpu.memory_space<vmem>>, vector<8x1xf32>,
    %c0_16 = arith.constant 0 : index
    %c0_17 = arith.constant 0 : index
    %25 = vector.load %arg9[%c0_16, %c0_17] : memref<8x1xf32, #tpu.memory_space<vmem>>, vector<8x1xf32>
    %26 = arith.mulf %25, %10 : vector<8x1xf32>
    %27 = arith.mulf %13, %3 : vector<8x128xf32>
    %cst_18 = arith.constant dense<0.000000e+00> : vector<8xf32>
    %28 = vector.multi_reduction <add>, %27, %cst_18 [1] : vector<8x128xf32> to vector<8xf32>
    %29 = vector.shape_cast %28 : vector<8xf32> to vector<8x1xf32>
    %30 = arith.addf %26, %29 : vector<8x1xf32>
    %c0_19 = arith.constant 0 : index
    %c0_20 = arith.constant 0 : index
    %31 = vector.load %arg9[%c0_19, %c0_20] : memref<8x1xf32, #tpu.memory_space<vmem>>, vector<8x1xf32>
    tpu.vector_store %arg9[%c0_19, %c0_20], %30 {strides = array<i32>} : memref<8x1xf32, #tpu.memory_space<vmem>>, vector<8x1xf32>,
    %c0_21 = arith.constant 0 : index
    %c0_22 = arith.constant 0 : index
    %32 = vector.load %arg7[%c0_21, %c0_22] : memref<8x1xf32, #tpu.memory_space<vmem>>, vector<8x1xf32>
    tpu.vector_store %arg7[%c0_21, %c0_22], %7 {strides = array<i32>} : memref<8x1xf32, #tpu.memory_space<vmem>>, vector<8x1xf32>,
    %c1_i32 = arith.constant 1 : i32
    %33 = arith.cmpi eq, %arg1, %c1_i32 : i32
    %34 = arith.extui %33 : i1 to i32
    %c0_i32_23 = arith.constant 0 : i32
    %35 = arith.cmpi ne, %34, %c0_i32_23 : i32
    scf.if %35 {
      %c0_24 = arith.constant 0 : index
      %c0_25 = arith.constant 0 : index
      %36 = vector.load %arg6[%c0_24, %c0_25] : memref<8x1xf32, #tpu.memory_space<vmem>>, vector<8x1xf32>
      %cst_26 = arith.constant 3.906250e-03 : f32
      %37 = vector.broadcast %cst_26 : f32 to vector<8x1xf32>
      %38 = arith.mulf %36, %37 : vector<8x1xf32>
      %c0_27 = arith.constant 0 : index
      %c0_28 = arith.constant 0 : index
      %39 = vector.load %arg3[%c0_27, %c0_28] : memref<8x1xf32, #tpu.memory_space<vmem>>, vector<8x1xf32>
      tpu.vector_store %arg3[%c0_27, %c0_28], %38 {strides = array<i32>} : memref<8x1xf32, #tpu.memory_space<vmem>>, vector<8x1xf32>,
      %c0_29 = arith.constant 0 : index
      %c0_30 = arith.constant 0 : index
      %40 = vector.load %arg7[%c0_29, %c0_30] : memref<8x1xf32, #tpu.memory_space<vmem>>, vector<8x1xf32>
      %c0_31 = arith.constant 0 : index
      %c0_32 = arith.constant 0 : index
      %41 = vector.load %arg4[%c0_31, %c0_32] : memref<8x1xf32, #tpu.memory_space<vmem>>, vector<8x1xf32>
      tpu.vector_store %arg4[%c0_31, %c0_32], %40 {strides = array<i32>} : memref<8x1xf32, #tpu.memory_space<vmem>>, vector<8x1xf32>,
      %c0_33 = arith.constant 0 : index
      %c0_34 = arith.constant 0 : index
      %42 = vector.load %arg9[%c0_33, %c0_34] : memref<8x1xf32, #tpu.memory_space<vmem>>, vector<8x1xf32>
      %c0_35 = arith.constant 0 : index
      %c0_36 = arith.constant 0 : index
      %43 = vector.load %arg8[%c0_35, %c0_36] : memref<8x1xf32, #tpu.memory_space<vmem>>, vector<8x1xf32>
      %44 = arith.divf %42, %43 : vector<8x1xf32>
      %c0_37 = arith.constant 0 : index
      %c0_38 = arith.constant 0 : index
      %45 = vector.load %arg5[%c0_37, %c0_38] : memref<8x1xf32, #tpu.memory_space<vmem>>, vector<8x1xf32>
      tpu.vector_store %arg5[%c0_37, %c0_38], %44 {strides = array<i32>} : memref<8x1xf32, #tpu.memory_space<vmem>>, vector<8x1xf32>,
    } else {
    }
    return
  }
  func.func @transform_0(%arg0: i32, %arg1: i32) -> (i32, i32) {
    %c0_i32 = arith.constant 0 : i32
    return %arg0, %arg1 : i32, i32
  }
  func.func @transform_1(%arg0: i32, %arg1: i32) -> (i32, i32) {
    %c0_i32 = arith.constant 0 : i32
    %c0_i32_0 = arith.constant 0 : i32
    return %arg0, %c0_i32 : i32, i32
  }
  func.func @transform_2(%arg0: i32, %arg1: i32) -> (i32, i32) {
    %c0_i32 = arith.constant 0 : i32
    %c0_i32_0 = arith.constant 0 : i32
    return %arg0, %c0_i32 : i32, i32
  }
  func.func @transform_3(%arg0: i32, %arg1: i32) -> (i32, i32) {
    %c0_i32 = arith.constant 0 : i32
    %c0_i32_0 = arith.constant 0 : i32
    return %arg0, %c0_i32 : i32, i32
  }
}

</mosaic_0001>

<llo_original>
// kernel: tpu_custom_call.1
$region0: #{tpu_custom_call.1}
  #allocation0 [shape = 'u32[]', space=smem, size = 0x4, offset = 0x4, fixed_abs, tag = 'smem constant byte address 0x4 - core index']
  #allocation1 [shape = 'u32[144,128]{1,0:T(1,128)}', space=vmem, size = 0x12000, scoped, tag = 'internal scratch']
  #allocation2 [shape = 'f32[8,1]{1,0:T(8,128)}', space=vmem, size = 0x1000, scoped, tag = 'scratch operand']
  #allocation3 [shape = 'f32[8,1]{1,0:T(8,128)}', space=vmem, size = 0x1000, scoped, tag = 'scratch operand']
  #allocation4 [shape = 'f32[8,1]{1,0:T(8,128)}', space=vmem, size = 0x1000, scoped, tag = 'scratch operand']
  #allocation5 [shape = 'f32[8,1]{1,0:T(8,128)}', space=vmem, size = 0x1000, scoped, tag = 'scratch operand']
  %s0 = inlined_call_operand.hbm [shape: f32[8,256], index: 0, kind: input, shape index: {}]
  %s1 = inlined_call_operand.vmem [shape: f32[8,1], index: 1, kind: output, shape index: {0}]
  %s2 = inlined_call_operand.vmem [shape: f32[8,1], index: 2, kind: output, shape index: {1}]
  %s3 = inlined_call_operand.vmem [shape: f32[8,1], index: 3, kind: output, shape index: {2}]
  %4 = xla_tuple %s1, %s2, %s3
  %s5 = sld [smem:[#allocation0]]
  $region65: #{tpu_custom_call.1} parent=0
    _
  %s7 = ssub.s32 1, %s5
  %s8 = scalar_select 0, %s7, %s5
  $region1: #{tpu_custom_call.1} parent=0
    #allocation6 [shape = 'u8[8192]{0}', space=vmem, size = 0x2000, scoped, tag = 'input window, operand 0']
    #allocation7 [shape = 's32[2]{0}', space=sflag, size = 0x8, scoped, tag = 'scoped memory for tpu_custom_call.1']
    %9 = vsyncpa [#allocation7], 0
    %s10 = scalar_lea.sflag [#allocation7], 1
    %11 = vsyncpa %s10, 0
    loop: start=0, step=1, limit=4
    $region2: #{tpu_custom_call.1} parent=1 // loop_pre_header
      _
    $region3: #{tpu_custom_call.1} parent=1 // loop_header
      %s13 = sphi 0, %s17
      %p14 = scmp.ge.s32.totalorder %s13, 4
      %s20 = sphi 0, %s32
      %s21 = sphi 0, %s28
      %s22 = sphi 0, %s20
      %s23 = sphi 0, %s21
      %s24 = sphi 0, %s22
      %s25 = sphi 0, %s23
      %s37 = sphi 0, %s39
      %s40 = sphi 0, %s37
      %s41 = sphi 0, %s40
      %s57 = sphi 0, %s41
      %s63 = sphi 0, %s65
      %s66 = sphi 0, %s63
      %s67 = sphi 0, %s66
      %s83 = sphi 0, %s67
      %s89 = sphi 0, %s91
      %s92 = sphi 0, %s89
      %s93 = sphi 0, %s92
      %s109 = sphi 0, %s93
      %s115 = sphi 0, %s117
      %s118 = sphi 0, %s115
      %s119 = sphi 0, %s118
      %s135 = sphi 0, %s119
    $region4: #{tpu_custom_call.1} parent=1 // loop_header_branch
      %16 = sbr.rel (%p14) target = $region8
    $region5: #{tpu_custom_call.1} parent=1 // loop_body
      %s18 = ssub.s32 %s13, 1
      %s19 = ssub.s32 %s13, 2
      %s26 = sadd.s32 1, %s21
      %p27 = scmp.ge.s32.totalorder %s26, 2
      %s28 = scalar_select %p27, 0, %s26
      %s29 = sadd.s32 1, %s20
      %s30 = scalar_select %p27, %s29, %s20
      %p31 = scmp.ge.s32.totalorder %s30, 1
      %s32 = scalar_select %p31, 0, %s30
      %s33 = ssub.s32 %s20, %s32
      %s34 = ssub.s32 %s21, %s28
      %s35 = sor.u32 %s33, %s34
      %p36 = scmp.eq.s32.totalorder %s35, 0
      %s38 = sadd.s32 %s37, 1
      %s39 = scalar_select %p36, %s37, %s38
      %p42 = pneg %p36
      %p43 = scmp.eq.s32.totalorder %s13, 1
      %p44 = por %p42, %p43
      %p45 = scmp.ne.s32.totalorder %s37, %s40
      %p46 = scmp.eq.s32.totalorder %s13, 0
      %p47 = por %p45, %p46
      %p48 = scmp.ne.s32.totalorder %s37, %s40
      %p49 = scmp.eq.s32.totalorder %s18, 1
      %p50 = por %p48, %p49
      %p51 = scmp.ne.s32.totalorder %s40, %s41
      %p52 = scmp.eq.s32.totalorder %s18, 0
      %p53 = por %p51, %p52
      %p54 = scmp.ne.s32.totalorder %s40, %s41
      %p55 = scmp.eq.s32.totalorder %s19, 1
      %p56 = por %p54, %p55
      %p58 = scmp.ne.s32.totalorder %s41, %s57
      %p59 = scmp.eq.s32.totalorder %s19, 0
      %p60 = por %p58, %p59
      %s61 = ssub.s32 %s20, %s32
      %p62 = scmp.eq.s32.totalorder %s61, 0
      %s64 = sadd.s32 %s63, 1
      %s65 = scalar_select %p62, %s63, %s64
      %p68 = pneg %p62
      %p69 = scmp.eq.s32.totalorder %s13, 1
      %p70 = por %p68, %p69
      %p71 = scmp.ne.s32.totalorder %s63, %s66
      %p72 = scmp.eq.s32.totalorder %s13, 0
      %p73 = por %p71, %p72
      %p74 = scmp.ne.s32.totalorder %s63, %s66
      %p75 = scmp.eq.s32.totalorder %s18, 1
      %p76 = por %p74, %p75
      %p77 = scmp.ne.s32.totalorder %s66, %s67
      %p78 = scmp.eq.s32.totalorder %s18, 0
      %p79 = por %p77, %p78
      %p80 = scmp.ne.s32.totalorder %s66, %s67
      %p81 = scmp.eq.s32.totalorder %s19, 1
      %p82 = por %p80, %p81
      %p84 = scmp.ne.s32.totalorder %s67, %s83
      %p85 = scmp.eq.s32.totalorder %s19, 0
      %p86 = por %p84, %p85
      %s87 = ssub.s32 %s20, %s32
      %p88 = scmp.eq.s32.totalorder %s87, 0
      %s90 = sadd.s32 %s89, 1
      %s91 = scalar_select %p88, %s89, %s90
      %p94 = pneg %p88
      %p95 = scmp.eq.s32.totalorder %s13, 1
      %p96 = por %p94, %p95
      %p97 = scmp.ne.s32.totalorder %s89, %s92
      %p98 = scmp.eq.s32.totalorder %s13, 0
      %p99 = por %p97, %p98
      %p100 = scmp.ne.s32.totalorder %s89, %s92
      %p101 = scmp.eq.s32.totalorder %s18, 1
      %p102 = por %p100, %p101
      %p103 = scmp.ne.s32.totalorder %s92, %s93
      %p104 = scmp.eq.s32.totalorder %s18, 0
      %p105 = por %p103, %p104
      %p106 = scmp.ne.s32.totalorder %s92, %s93
      %p107 = scmp.eq.s32.totalorder %s19, 1
      %p108 = por %p106, %p107
      %p110 = scmp.ne.s32.totalorder %s93, %s109
      %p111 = scmp.eq.s32.totalorder %s19, 0
      %p112 = por %p110, %p111
      %s113 = ssub.s32 %s20, %s32
      %p114 = scmp.eq.s32.totalorder %s113, 0
      %s116 = sadd.s32 %s115, 1
      %s117 = scalar_select %p114, %s115, %s116
      %p120 = pneg %p114
      %p121 = scmp.eq.s32.totalorder %s13, 1
      %p122 = por %p120, %p121
      %p123 = scmp.ne.s32.totalorder %s115, %s118
      %p124 = scmp.eq.s32.totalorder %s13, 0
      %p125 = por %p123, %p124
      %p126 = scmp.ne.s32.totalorder %s115, %s118
      %p127 = scmp.eq.s32.totalorder %s18, 1
      %p128 = por %p126, %p127
      %p129 = scmp.ne.s32.totalorder %s118, %s119
      %p130 = scmp.eq.s32.totalorder %s18, 0
      %p131 = por %p129, %p130
      %p132 = scmp.ne.s32.totalorder %s118, %s119
      %p133 = scmp.eq.s32.totalorder %s19, 1
      %p134 = por %p132, %p133
      %p136 = scmp.ne.s32.totalorder %s119, %s135
      %p137 = scmp.eq.s32.totalorder %s19, 0
      %p138 = por %p136, %p137
      %p139 = scmp.le.s32.totalorder 1, %s13
      %p140 = scmp.lt.s32.totalorder %s13, 3
      %p141 = pnand %p139, %p140
      %p142 = pneg %p141
      // Predicated region
      $region9: #{tpu_custom_call.1} parent=5 // pred_check
        _
      $region10: #{tpu_custom_call.1} parent=5 // pred_check_branch
        %144 = sbr.rel (%p141) target = $region12
      $region11: #{tpu_custom_call.1} parent=5 // pred_region
        %s145 = ssub.s32 %s13, 1
      $region12: #{tpu_custom_call.1} parent=5 // pred_fallthru
        _
      %p146 = scmp.lt.s32.totalorder %s13, 2
      // Predicated region
      $region13: #{tpu_custom_call.1} parent=5 // pred_check
        %p147 = pneg %p146
      $region14: #{tpu_custom_call.1} parent=5 // pred_check_branch
        %149 = sbr.rel (%p147) target = $region16
      $region15: #{tpu_custom_call.1} parent=5 // pred_region
        // Predicated region
        $region17: #{tpu_custom_call.1} parent=15 // pred_check
          %p150 = pneg %p47
        $region18: #{tpu_custom_call.1} parent=15 // pred_check_branch
          %152 = sbr.rel (%p150) target = $region20
        $region19: #{tpu_custom_call.1} parent=15 // pred_region
          %s153 = sand.u32 %s37, 1
          %s154 = scalar_lea.sflag [#allocation7], %s153
          %s155 = sand.u32 %s37, 1
          %s156 = smul.addr %s155, 8
          %s157 = scalar_lea.vmem [#allocation6], %s156
          %s159 = ssub.s32 128, 128
          %160 = vsyncadd %s154, %s159
          %s161 = smul.addr %s20, 2
          %s162 = sadd.s32 %s21, %s161
          %s163 = smul.addr %s162, 128
          %s164 = scalar_lea.hbm %s0, %s163
          %s166 = sshll.u32 %s157, 4
          %s167 = int_to_ptr.vmem [resolvable:$true] %s166
          %169 = dma.hbm_to_vmem [thread:$0]  %s164, 128, %s167, %s154
        $region20: #{tpu_custom_call.1} parent=15 // pred_fallthru
          _
      $region16: #{tpu_custom_call.1} parent=5 // pred_fallthru
        _
      %p170 = scmp.le.s32.totalorder 1, %s13
      %p171 = scmp.lt.s32.totalorder %s13, 3
      %p172 = pnand %p170, %p171
      %p173 = pneg %p172
      // Predicated region
      $region21: #{tpu_custom_call.1} parent=5 // pred_check
        _
      $region22: #{tpu_custom_call.1} parent=5 // pred_check_branch
        %175 = sbr.rel (%p172) target = $region24
      $region23: #{tpu_custom_call.1} parent=5 // pred_region
        %s176 = ssub.s32 %s13, 1
        %s177 = sand.u32 %s40, 1
        %s178 = scalar_lea.sflag [#allocation7], %s177
        %s179 = sand.u32 %s40, 1
        %s180 = smul.addr %s179, 8
        %s181 = scalar_lea.vmem [#allocation6], %s180
        // Predicated region
        $region25: #{tpu_custom_call.1} parent=23 // pred_check
          %p182 = pneg %p53
        $region26: #{tpu_custom_call.1} parent=23 // pred_check_branch
          %184 = sbr.rel (%p182) target = $region28
        $region27: #{tpu_custom_call.1} parent=23 // pred_region
          %185 = dma.done %s178, 128
        $region28: #{tpu_custom_call.1} parent=23 // pred_fallthru
          _
        %s186 = sand.u32 %s40, 1
        %s187 = scalar_lea.sflag [#allocation7], %s186
        %s188 = sand.u32 %s40, 1
        %s189 = smul.addr %s188, 8
        %s190 = scalar_lea.vmem [#allocation6], %s189
        %p191 = pneg %p53
        %p192 = pneg %p50
        %p193 = pneg %p79
        %p194 = pneg %p76
        %p195 = scmp.lt.s32.totalorder %s22, 0
        %s196 = scalar_select %p195, %s22, 0
        %s197 = smul.addr %s196, 8
        %s198 = scalar_lea.vmem %s1, %s197
        %p199 = pneg %p105
        %p200 = pneg %p102
        %p201 = scmp.lt.s32.totalorder %s22, 0
        %s202 = scalar_select %p201, %s22, 0
        %s203 = smul.addr %s202, 8
        %s204 = scalar_lea.vmem %s2, %s203
        %p205 = pneg %p131
        %p206 = pneg %p128
        %p207 = scmp.lt.s32.totalorder %s22, 0
        %s208 = scalar_select %p207, %s22, 0
        %s209 = smul.addr %s208, 8
        %s210 = scalar_lea.vmem %s3, %s209
        %p211 = scmp.lt.s32.totalorder %s22, 0
        %s212 = scalar_select %p211, %s22, 0
        %s213 = smul.addr %s212, 8
        %s214 = scalar_lea.vmem %s1, %s213
        %p215 = scmp.lt.s32.totalorder %s22, 0
        %s216 = scalar_select %p215, %s22, 0
        %s217 = smul.addr %s216, 8
        %s218 = scalar_lea.vmem %s2, %s217
        %p219 = scmp.lt.s32.totalorder %s22, 0
        %s220 = scalar_select %p219, %s22, 0
        %s221 = smul.addr %s220, 8
        %s222 = scalar_lea.vmem %s3, %s221
        %p223 = scmp.eq.s32.totalorder %s23, 0
        // Predicated region
        $region29: #{tpu_custom_call.1} parent=23 // pred_check
          %p224 = pneg %p223
        $region30: #{tpu_custom_call.1} parent=23 // pred_check_branch
          %226 = sbr.rel (%p224) target = $region32
        $region31: #{tpu_custom_call.1} parent=23 // pred_region
          %vm227 = vcmask 7168
          %228 = vst.msk [vmem:[#allocation2] sm:$0xff] %vm227, 0.0
          %229 = vst.msk [vmem:[#allocation3] sm:$0xff] %vm227, -inf
          %230 = vst.msk [vmem:[#allocation4] sm:$0xff] %vm227, 0.0
          %231 = vst.msk [vmem:[#allocation5] sm:$0xff] %vm227, 0.0
        $region32: #{tpu_custom_call.1} parent=23 // pred_fallthru
          _
        %v232 = vld [vmem:[%s181] sm:$0xff]
        %233 = vmax.xlane.f32.xlu0 %v232
        %v234 = vpop.xlane.xlu0 %233
        %v235 = vld [vmem:[#allocation3] sm:$0xff]
        %v236 = vmax.f32 %v235, %v234
        %v237 = vsub.f32 %v235, %v236
        %v238 = vmul.f32 %v237, 1.442695
        %v239 = vpow.pop %v238
        %241 = vset.pattern.permute.xlu0 0
        %242 = vperm.xlu0 %241, %v236
        %v243 = vpop.permute.xlu0 %242
        %v245 = vsub.f32 %v232, %v243
        %v246 = vmul.f32 %v245, 1.442695
        %v247 = vpow.pop %v246
        %v248 = vld [vmem:[#allocation2] sm:$0xff]
        %249 = vadd.xlane.f32.xlu0 %v232
        %v250 = vpop.xlane.xlu0 %249
        %v251 = vadd.f32 %v248, %v250
        %vm252 = vcmask 7168
        %253 = vst.msk [vmem:[#allocation2] sm:$0xff] %vm252, %v251
        %v254 = vld [vmem:[#allocation4] sm:$0xff]
        %v255 = vmul.f32 %v254, %v239
        %256 = vadd.xlane.f32.xlu0 %v247
        %v257 = vpop.xlane.xlu0 %256
        %v258 = vadd.f32 %v255, %v257
        %259 = vst.msk [vmem:[#allocation4] sm:$0xff] %vm252, %v258
        %v260 = vld [vmem:[#allocation5] sm:$0xff]
        %v261 = vmul.f32 %v260, %v239
        %v262 = vmul.f32 %v247, %v232
        %263 = vadd.xlane.f32.xlu0 %v262
        %v264 = vpop.xlane.xlu0 %263
        %v265 = vadd.f32 %v261, %v264
        %266 = vst.msk [vmem:[#allocation5] sm:$0xff] %vm252, %v265
        %267 = vst.msk [vmem:[#allocation3] sm:$0xff] %vm252, %v236
        %p268 = scmp.eq.s32.totalorder %s23, 1
        // Predicated region
        $region33: #{tpu_custom_call.1} parent=23 // pred_check
          %p269 = pneg %p268
        $region34: #{tpu_custom_call.1} parent=23 // pred_check_branch
          %271 = sbr.rel (%p269) target = $region36
        $region35: #{tpu_custom_call.1} parent=23 // pred_region
          %v272 = vld [vmem:[#allocation2] sm:$0xff]
          %v273 = vmul.f32 %v272, 0.00390625
          %274 = vst.msk [vmem:[%s214] sm:$0xff] %vm252, %v273
          %v275 = vld [vmem:[#allocation3] sm:$0xff]
          %276 = vst.msk [vmem:[%s218] sm:$0xff] %vm252, %v275
          %v277 = vld [vmem:[#allocation5] sm:$0xff]
          %v278 = vld [vmem:[#allocation4] sm:$0xff]
          %v279 = vrcp.pop %v278
          %v280 = vmul.f32 %v277, %v279
          %281 = vst.msk [vmem:[%s222] sm:$0xff] %vm252, %v280
        $region36: #{tpu_custom_call.1} parent=23 // pred_fallthru
          _
        %p282 = scmp.lt.s32.totalorder %s22, 0
        %s283 = scalar_select %p282, %s22, 0
        %s284 = smul.addr %s283, 8
        %s285 = scalar_lea.vmem %s1, %s284
        %p286 = scmp.lt.s32.totalorder %s22, 0
        %s287 = scalar_select %p286, %s22, 0
        %s288 = smul.addr %s287, 8
        %s289 = scalar_lea.vmem %s2, %s288
        %p290 = scmp.lt.s32.totalorder %s22, 0
        %s291 = scalar_select %p290, %s22, 0
        %s292 = smul.addr %s291, 8
        %s293 = scalar_lea.vmem %s3, %s292
        // Predicated region
        $region37: #{tpu_custom_call.1} parent=23 // pred_check
          %p294 = pneg %p76
        $region38: #{tpu_custom_call.1} parent=23 // pred_check_branch
          %296 = sbr.rel (%p294) target = $region40
        $region39: #{tpu_custom_call.1} parent=23 // pred_region
          _
        $region40: #{tpu_custom_call.1} parent=23 // pred_fallthru
          _
        // Predicated region
        $region41: #{tpu_custom_call.1} parent=23 // pred_check
          %p297 = pneg %p102
        $region42: #{tpu_custom_call.1} parent=23 // pred_check_branch
          %299 = sbr.rel (%p297) target = $region44
        $region43: #{tpu_custom_call.1} parent=23 // pred_region
          _
        $region44: #{tpu_custom_call.1} parent=23 // pred_fallthru
          _
        // Predicated region
        $region45: #{tpu_custom_call.1} parent=23 // pred_check
          %p300 = pneg %p128
        $region46: #{tpu_custom_call.1} parent=23 // pred_check_branch
          %302 = sbr.rel (%p300) target = $region48
        $region47: #{tpu_custom_call.1} parent=23 // pred_region
          _
        $region48: #{tpu_custom_call.1} parent=23 // pred_fallthru
          _
        // Predicated region
        $region49: #{tpu_custom_call.1} parent=23 // pred_check
          %p303 = pneg %p76
        $region50: #{tpu_custom_call.1} parent=23 // pred_check_branch
          %305 = sbr.rel (%p303) target = $region52
        $region51: #{tpu_custom_call.1} parent=23 // pred_region
          %p306 = scmp.lt.s32.totalorder %s22, 0
          %s307 = scalar_select %p306, %s22, 0
          %s308 = smul.addr %s307, 8
          %s309 = scalar_lea.vmem %s1, %s308
        $region52: #{tpu_custom_call.1} parent=23 // pred_fallthru
          _
        // Predicated region
        $region53: #{tpu_custom_call.1} parent=23 // pred_check
          %p310 = pneg %p102
        $region54: #{tpu_custom_call.1} parent=23 // pred_check_branch
          %312 = sbr.rel (%p310) target = $region56
        $region55: #{tpu_custom_call.1} parent=23 // pred_region
          %p313 = scmp.lt.s32.totalorder %s22, 0
          %s314 = scalar_select %p313, %s22, 0
          %s315 = smul.addr %s314, 8
          %s316 = scalar_lea.vmem %s2, %s315
        $region56: #{tpu_custom_call.1} parent=23 // pred_fallthru
          _
        // Predicated region
        $region57: #{tpu_custom_call.1} parent=23 // pred_check
          %p317 = pneg %p128
        $region58: #{tpu_custom_call.1} parent=23 // pred_check_branch
          %319 = sbr.rel (%p317) target = $region60
        $region59: #{tpu_custom_call.1} parent=23 // pred_region
          %p320 = scmp.lt.s32.totalorder %s22, 0
          %s321 = scalar_select %p320, %s22, 0
          %s322 = smul.addr %s321, 8
          %s323 = scalar_lea.vmem %s3, %s322
        $region60: #{tpu_custom_call.1} parent=23 // pred_fallthru
          _
      $region24: #{tpu_custom_call.1} parent=5 // pred_fallthru
        _
      %p324 = scmp.le.s32.totalorder 2, %s13
      // Predicated region
      $region61: #{tpu_custom_call.1} parent=5 // pred_check
        %p325 = pneg %p324
      $region62: #{tpu_custom_call.1} parent=5 // pred_check_branch
        %327 = sbr.rel (%p325) target = $region64
      $region63: #{tpu_custom_call.1} parent=5 // pred_region
        %s328 = ssub.s32 %s13, 2
      $region64: #{tpu_custom_call.1} parent=5 // pred_fallthru
        _
    $region6: #{tpu_custom_call.1} parent=1 // loop_footer
      %s17 = sadd.s32 1, %s13
    $region7: #{tpu_custom_call.1} parent=1 // loop_footer_branch
      %12 = sbr.rel target = $region3
    $region8: #{tpu_custom_call.1} parent=1 // loop_exit
      _
    %329 = vsyncpa [#allocation7], 1
    %s330 = scalar_lea.sflag [#allocation7], 1
    %331 = vsyncpa %s330, 1

</llo_original>
